<compile_context>
chip_gen: v7x
topology: tpu7x:2x2x1
jax: 0.10.0
libtpu: 0.0.40
codegen_flags: <defaults>
</compile_context>

<pallas_src>
import functools

import jax
import jax.numpy as jnp
from jax.experimental import pallas as pl
from jax.experimental.pallas import tpu as pltpu

_NEG_INF = -1e30                      # bias for padded action columns
_VMEM_STREAM_BUDGET = 8 * 1024 * 1024  # bytes of double-buffered streams/tile


def _round_up(n, m):
    return ((n + m - 1) // m) * m


def _choose_batch_tile(batch, d, a_pad, x_itemsize):
    """Largest batch tile (multiple of 8) whose double-buffered streams fit budget."""
    # Streamed bytes per batch row (x tile + uniforms + probs out + action out),
    # times 2 for the pipeline's double buffering.  W^T / bias are resident.
    per_row = 2 * (d * x_itemsize + a_pad * 4 + a_pad * 4 + 4)
    tb = _VMEM_STREAM_BUDGET // max(per_row, 1)
    tb = max(8, min(int(tb), 1024))
    tb = (tb // 8) * 8
    tb = min(tb, _round_up(batch, 8))
    return max(8, tb)


def discrete_head_kernel(x_ref, wt_ref, b_ref, u_ref, probs_ref, action_ref):
    # ---- linear layer: logits = x @ W^T + b  (bf16 MXU feed, f32 accumulate) --
    logits = jnp.dot(x_ref[...], wt_ref[...],
                     preferred_element_type=jnp.float32) + b_ref[...]   # (TB, A_pad)

    # ---- softmax over the action axis (padded columns -> exactly 0) ----------
    m = jnp.max(logits, axis=-1, keepdims=True)
    e = jnp.exp(logits - m)
    denom = jnp.sum(e, axis=-1, keepdims=True)
    probs_ref[...] = e / denom

    # ---- Categorical sample via Gumbel-max -----------------------------------
    # g = -log(-log(u)); action = argmax(logits + g).  Padded columns carry
    # logits = -1e30 and can never win.  argmax is done with iota + compare +
    # integer min so it lowers cleanly on the XLU (first index on ties).
    g = -jnp.log(-jnp.log(u_ref[...]))                                  # (TB, A_pad)
    z = logits + g
    zmax = jnp.max(z, axis=-1, keepdims=True)
    a_pad = z.shape[-1]
    idx = jax.lax.broadcasted_iota(jnp.int32, z.shape, 1)
    picked = jnp.where(z >= zmax, idx, a_pad)
    action_ref[...] = jnp.min(picked, axis=-1, keepdims=True).astype(jnp.int32)


@functools.partial(jax.jit, static_argnames=("matmul_dtype",))
def discrete_head_forward(x, weight, bias, key, *, matmul_dtype=jnp.bfloat16):
    """x: (B, D) f32, weight: (A, D), bias: (A,), key: PRNG key for sampling."""
    B, D = x.shape
    A = weight.shape[0]

    a_pad = _round_up(max(A, 128), 128)                 # lane-dense action axis
    x_itemsize = jnp.dtype(matmul_dtype).itemsize
    tb = _choose_batch_tile(B, D, a_pad, x_itemsize)
    b_pad = _round_up(B, tb)
    grid = (b_pad // tb,)

    # ---- glue: pad / cast / transpose parameters, draw sampling uniforms -----
    x_p = jnp.pad(x.astype(matmul_dtype), ((0, b_pad - B), (0, 0)))
    wt_p = jnp.pad(jnp.transpose(weight).astype(matmul_dtype),
                   ((0, 0), (0, a_pad - A)))                         # (D, A_pad)
    b_p = jnp.pad(bias.astype(jnp.float32).reshape(1, A),
                  ((0, 0), (0, a_pad - A)), constant_values=_NEG_INF)
    # Per-(row, action) uniforms in (0, 1) for Gumbel-max; each batch tile
    # reads its own slab, so tiles draw independent randomness.
    u = jax.random.uniform(key, (b_pad, a_pad), jnp.float32,
                           minval=1e-7, maxval=1.0)

    probs, action = pl.pallas_call(
        discrete_head_kernel,
        out_shape=(
            jax.ShapeDtypeStruct((b_pad, a_pad), jnp.float32),   # softmax probs
            jax.ShapeDtypeStruct((b_pad, 1), jnp.int32),         # sampled action
        ),
        grid=grid,
        in_specs=[
            pl.BlockSpec((tb, D), lambda i: (i, 0)),        # x: streamed per tile
            pl.BlockSpec((D, a_pad), lambda i: (0, 0)),     # W^T: VMEM-resident
            pl.BlockSpec((1, a_pad), lambda i: (0, 0)),     # bias: VMEM-resident
            pl.BlockSpec((tb, a_pad), lambda i: (i, 0)),    # uniforms: per tile
        ],
        out_specs=(
            pl.BlockSpec((tb, a_pad), lambda i: (i, 0)),
            pl.BlockSpec((tb, 1), lambda i: (i, 0)),
        ),
        compiler_params=pltpu.CompilerParams(
            dimension_semantics=("parallel",)),
    )(x_p, wt_p, b_p, u)

    return action[:B], probs[:B, :A]


def make_params(key, input_dim, action_dim):
    """Deterministic xavier_uniform_ weight + zero bias, matching the module init."""
    bound = (6.0 / (input_dim + action_dim)) ** 0.5
    weight = jax.random.uniform(key, (action_dim, input_dim),
                                dtype=jnp.float32, minval=-bound, maxval=bound)
    bias = jnp.zeros((action_dim,), jnp.float32)
    return weight, bias


if __name__ == "__main__":
    key = jax.random.PRNGKey(0)
    k_w, k_x, k_s = jax.random.split(key, 3)

    batch, input_dim, action_dim = 2, 32, 8
    weight, bias = make_params(k_w, input_dim, action_dim)
    x = jax.random.normal(k_x, (batch, input_dim), dtype=jnp.float32)

    action, probs = discrete_head_forward(x, weight, bias, k_s)
    jax.block_until_ready((action, probs))

    # sanity: shapes, probs rows sum to 1, actions in range
    assert probs.shape == (batch, action_dim)
    assert action.shape == (batch, 1)
    assert bool(jnp.all(jnp.abs(jnp.sum(probs, axis=1) - 1.0) < 1e-4))
    assert bool(jnp.all((action >= 0) & (action < action_dim)))

    print("KERNEL_OK")
</pallas_src>

<mosaic_0001>
module attributes {stable_mosaic.version = 11 : i64} {
  func.func @discrete_head_kernel(%arg0: i32, %arg1: memref<8x32xbf16, #tpu.memory_space<vmem>>, %arg2: memref<32x128xbf16, #tpu.memory_space<vmem>>, %arg3: memref<1x128xf32, #tpu.memory_space<vmem>>, %arg4: memref<8x128xf32, #tpu.memory_space<vmem>>, %arg5: memref<8x128xf32, #tpu.memory_space<vmem>>, %arg6: memref<8x1xi32, #tpu.memory_space<vmem>>) attributes {dimension_semantics = [#tpu.dimension_semantics<parallel>], iteration_bounds = array<i64: 1>, scalar_prefetch = 0 : i64, scratch_operands = 0 : i64, tpu.core_type = #tpu.core_type<tc>, window_params = [{transform_indices = @transform_0, window_bounds = array<i64: 8, 32>}, {pipeline_mode = #tpu.pipeline_mode<synchronous>, transform_indices = @transform_1, window_bounds = array<i64: 32, 128>}, {pipeline_mode = #tpu.pipeline_mode<synchronous>, transform_indices = @transform_2, window_bounds = array<i64: 1, 128>}, {transform_indices = @transform_3, window_bounds = array<i64: 8, 128>}, {transform_indices = @transform_4, window_bounds = array<i64: 8, 128>}, {transform_indices = @transform_5, window_bounds = array<i64: 8, 1>}]} {
    %c0 = arith.constant 0 : index
    %c0_0 = arith.constant 0 : index
    %0 = vector.load %arg1[%c0, %c0_0] : memref<8x32xbf16, #tpu.memory_space<vmem>>, vector<8x32xbf16>
    %c0_1 = arith.constant 0 : index
    %c0_2 = arith.constant 0 : index
    %1 = vector.load %arg2[%c0_1, %c0_2] : memref<32x128xbf16, #tpu.memory_space<vmem>>, vector<32x128xbf16>
    %cst = arith.constant dense<0.000000e+00> : vector<8x128xf32>
    %2 = tpu.matmul %0, %1, %cst {dimension_numbers = #tpu.dot_dimension_numbers<[1], [0], [0], [1], [0, 0, 1, 1], [], []>} : vector<8x32xbf16>, vector<32x128xbf16>, vector<8x128xf32> -> vector<8x128xf32>
    %c0_3 = arith.constant 0 : index
    %c0_4 = arith.constant 0 : index
    %3 = vector.load %arg3[%c0_3, %c0_4] : memref<1x128xf32, #tpu.memory_space<vmem>>, vector<1x128xf32>
    %4 = vector.broadcast %3 : vector<1x128xf32> to vector<8x128xf32>
    %5 = arith.addf %2, %4 : vector<8x128xf32>
    %cst_5 = arith.constant dense<0xFF800000> : vector<8xf32>
    %6 = vector.multi_reduction <maximumf>, %5, %cst_5 [1] : vector<8x128xf32> to vector<8xf32>
    %7 = vector.shape_cast %6 : vector<8xf32> to vector<8x1xf32>
    %8 = vector.broadcast %7 : vector<8x1xf32> to vector<8x128xf32>
    %9 = arith.subf %5, %8 : vector<8x128xf32>
    %10 = math.exp %9 : vector<8x128xf32>
    %cst_6 = arith.constant dense<0.000000e+00> : vector<8xf32>
    %11 = vector.multi_reduction <add>, %10, %cst_6 [1] : vector<8x128xf32> to vector<8xf32>
    %12 = vector.shape_cast %11 : vector<8xf32> to vector<8x1xf32>
    %13 = vector.broadcast %12 : vector<8x1xf32> to vector<8x128xf32>
    %14 = arith.divf %10, %13 : vector<8x128xf32>
    %c0_7 = arith.constant 0 : index
    %c0_8 = arith.constant 0 : index
    %15 = vector.load %arg5[%c0_7, %c0_8] : memref<8x128xf32, #tpu.memory_space<vmem>>, vector<8x128xf32>
    tpu.vector_store %arg5[%c0_7, %c0_8], %14 {strides = array<i32>} : memref<8x128xf32, #tpu.memory_space<vmem>>, vector<8x128xf32>,
    %c0_9 = arith.constant 0 : index
    %c0_10 = arith.constant 0 : index
    %16 = vector.load %arg4[%c0_9, %c0_10] : memref<8x128xf32, #tpu.memory_space<vmem>>, vector<8x128xf32>
    %17 = math.log %16 : vector<8x128xf32>
    %cst_11 = arith.constant 0.000000e+00 : f32
    %18 = vector.broadcast %cst_11 : f32 to vector<8x128xf32>
    %19 = arith.subf %18, %17 : vector<8x128xf32>
    %20 = math.log %19 : vector<8x128xf32>
    %cst_12 = arith.constant 0.000000e+00 : f32
    %21 = vector.broadcast %cst_12 : f32 to vector<8x128xf32>
    %22 = arith.subf %21, %20 : vector<8x128xf32>
    %23 = arith.addf %5, %22 : vector<8x128xf32>
    %cst_13 = arith.constant dense<0xFF800000> : vector<8xf32>
    %24 = vector.multi_reduction <maximumf>, %23, %cst_13 [1] : vector<8x128xf32> to vector<8xf32>
    %25 = vector.shape_cast %24 : vector<8xf32> to vector<8x1xf32>
    %26 = tpu.iota {dimensions = array<i32: 1>} : vector<8x128xi32>
    %27 = vector.broadcast %25 : vector<8x1xf32> to vector<8x128xf32>
    %28 = arith.cmpf oge, %23, %27 : vector<8x128xf32>
    %c128_i32 = arith.constant 128 : i32
    %29 = vector.broadcast %c128_i32 : i32 to vector<8x128xi32>
    %30 = arith.select %28, %26, %29 : vector<8x128xi1>, vector<8x128xi32>
    %cst_14 = arith.constant dense<2147483647> : vector<8xi32>
    %31 = vector.multi_reduction <minsi>, %30, %cst_14 [1] : vector<8x128xi32> to vector<8xi32>
    %32 = vector.shape_cast %31 : vector<8xi32> to vector<8x1xi32>
    %c0_15 = arith.constant 0 : index
    %c0_16 = arith.constant 0 : index
    %33 = vector.load %arg6[%c0_15, %c0_16] : memref<8x1xi32, #tpu.memory_space<vmem>>, vector<8x1xi32>
    tpu.vector_store %arg6[%c0_15, %c0_16], %32 {strides = array<i32>} : memref<8x1xi32, #tpu.memory_space<vmem>>, vector<8x1xi32>,
    return
  }
  func.func @transform_0(%arg0: i32) -> (i32, i32) {
    %c0_i32 = arith.constant 0 : i32
    %c0_i32_0 = arith.constant 0 : i32
    return %arg0, %c0_i32 : i32, i32
  }
  func.func @transform_1(%arg0: i32) -> (i32, i32) {
    %c0_i32 = arith.constant 0 : i32
    %c0_i32_0 = arith.constant 0 : i32
    %c0_i32_1 = arith.constant 0 : i32
    return %c0_i32, %c0_i32_0 : i32, i32
  }
  func.func @transform_2(%arg0: i32) -> (i32, i32) {
    %c0_i32 = arith.constant 0 : i32
    %c0_i32_0 = arith.constant 0 : i32
    %c0_i32_1 = arith.constant 0 : i32
    return %c0_i32, %c0_i32_0 : i32, i32
  }
  func.func @transform_3(%arg0: i32) -> (i32, i32) {
    %c0_i32 = arith.constant 0 : i32
    %c0_i32_0 = arith.constant 0 : i32
    return %arg0, %c0_i32 : i32, i32
  }
  func.func @transform_4(%arg0: i32) -> (i32, i32) {
    %c0_i32 = arith.constant 0 : i32
    %c0_i32_0 = arith.constant 0 : i32
    return %arg0, %c0_i32 : i32, i32
  }
  func.func @transform_5(%arg0: i32) -> (i32, i32) {
    %c0_i32 = arith.constant 0 : i32
    %c0_i32_0 = arith.constant 0 : i32
    return %arg0, %c0_i32 : i32, i32
  }
}

</mosaic_0001>

<llo_original>
// kernel: discrete_head_forward.1
$region0: #{discrete_head_forward.1}
  #allocation0 [shape = 'u32[]', space=smem, size = 0x4, offset = 0x4, fixed_abs, tag = 'smem constant byte address 0x4 - core index']
  #allocation1 [shape = 'u32[144,128]{1,0:T(1,128)}', space=vmem, size = 0x12000, scoped, tag = 'internal scratch']
  %s0 = inlined_call_operand.vmem [shape: bf16[8,32], index: 0, kind: input, shape index: {}]
  %s1 = inlined_call_operand.vmem [shape: bf16[32,128], index: 1, kind: input, shape index: {}]
  %s2 = inlined_call_operand.vmem [shape: f32[1,128], index: 2, kind: input, shape index: {}]
  %s3 = inlined_call_operand.vmem [shape: f32[8,128], index: 3, kind: input, shape index: {}]
  %s4 = inlined_call_operand.vmem [shape: f32[8,128], index: 4, kind: output, shape index: {0}]
  %s5 = inlined_call_operand.vmem [shape: s32[8,1], index: 5, kind: output, shape index: {1}]
  %6 = xla_tuple %s4, %s5
  %s7 = sld [smem:[#allocation0]]
  $region34: #{discrete_head_forward.1} parent=0
    _
  %s9 = ssub.s32 1, %s7
  %s10 = scalar_select 0, %s9, %s7
  // Predicated region
  $region2: #{discrete_head_forward.1} parent=0 // pred_check
    _
  $region3: #{discrete_head_forward.1} parent=0 // pred_check_branch
    %12 = sbr.rel (0) target = $region5
  $region4: #{discrete_head_forward.1} parent=0 // pred_region
    _
  $region5: #{discrete_head_forward.1} parent=0 // pred_fallthru
    _
  // Predicated region
  $region6: #{discrete_head_forward.1} parent=0 // pred_check
    _
  $region7: #{discrete_head_forward.1} parent=0 // pred_check_branch
    %14 = sbr.rel (0) target = $region9
  $region8: #{discrete_head_forward.1} parent=0 // pred_region
    _
  $region9: #{discrete_head_forward.1} parent=0 // pred_fallthru
    _
  // Predicated region
  $region10: #{discrete_head_forward.1} parent=0 // pred_check
    _
  $region11: #{discrete_head_forward.1} parent=0 // pred_check_branch
    %16 = sbr.rel (0) target = $region13
  $region12: #{discrete_head_forward.1} parent=0 // pred_region
    _
  $region13: #{discrete_head_forward.1} parent=0 // pred_fallthru
    _
  // Predicated region
  $region14: #{discrete_head_forward.1} parent=0 // pred_check
    _
  $region15: #{discrete_head_forward.1} parent=0 // pred_check_branch
    %18 = sbr.rel (0) target = $region17
  $region16: #{discrete_head_forward.1} parent=0 // pred_region
    _
  $region17: #{discrete_head_forward.1} parent=0 // pred_fallthru
    _
  %v20 = vld [vmem:[%s0] sm:$0xf]
  %v21 = vld [vmem:[%s1] sm:$0xf]
  %v22 = vld [vmem:[%s1 + $0x4] sm:$0xf]
  %v23 = vld [vmem:[%s1 + $0x8] sm:$0xf]
  %v24 = vld [vmem:[%s1 + $0xc] sm:$0xf]
  %v25 = vld [vmem:[%s2] sm:$0x1]
  %v27 = vlaneseq
  %v28 = vshrl.u32 %v27, 7
  %v29 = vsub.s32 0, %v28
  %v30 = vrot.slane %v25, %v29
  %v36 = vunpack.c.l.b16 %v21
  %v37 = vunpack.c.l.b16 %v22
  %v38 = vunpack.c.l.b16 %v23
  %v39 = vunpack.c.l.b16 %v24
  %v40 = vpack.c.b16 %v37, %v36
  %v41 = vpack.c.b16 %v39, %v38
  %vm44 = vcmask 261120
  %v46 = vsel %vm44, %v20, 0
  %48 = vmatprep.subr.bf16.mxu0 0
  %49 = vmatpush1.bf16.msra.mxu0 %v40
  %50 = vmatprep.subr.bf16.mxu0 0
  %51 = vmatpush1.bf16.msra.mxu0 %v41
  %52 = vmatprep.subr.bf16.mxu0 0
  %53 = vmatpush1.bf16.msra.mxu0 0
  %54 = vmatprep.subr.bf16.mxu0 0
  %55 = vmatpush1.bf16.msra.mxu0 0
  %56 = vmatprep.subr.bf16.mxu0 0
  %57 = vmatpush1.bf16.msra.mxu0 0
  %58 = vmatprep.subr.bf16.mxu0 0
  %59 = vmatpush1.bf16.msra.mxu0 0
  %60 = vmatprep.subr.bf16.mxu0 0
  %61 = vmatpush1.bf16.msra.mxu0 0
  %62 = vmatprep.subr.bf16.mxu0 0
  %63 = vmatpush1.bf16.msra.mxu0 0
  %64 = vmatprep.subr.bf16.mxu0 0
  %65 = vmatpush1.bf16.msra.mxu0 0
  %66 = vmatprep.subr.bf16.mxu0 0
  %67 = vmatpush1.bf16.msra.mxu0 0
  %68 = vmatprep.subr.bf16.mxu0 0
  %69 = vmatpush1.bf16.msra.mxu0 0
  %70 = vmatprep.subr.bf16.mxu0 0
  %71 = vmatpush1.bf16.msra.mxu0 0
  %72 = vmatprep.subr.bf16.mxu0 0
  %73 = vmatpush1.bf16.msra.mxu0 0
  %74 = vmatprep.subr.bf16.mxu0 0
  %75 = vmatpush1.bf16.msra.mxu0 0
  %76 = vmatprep.subr.bf16.mxu0 0
  %77 = vmatpush1.bf16.msra.mxu0 0
  %78 = vmatprep.subr.bf16.mxu0 0
  %79 = vmatpush1.bf16.msra.mxu0 0
  %80 = vmatprep.mubr.bf16.mxu0 0
  %81 = vmatmul.mubr.bf16.gmra.mrb[0].mxu0 %v46
  %v82 = vpop.f32.mrb[0].mxu0
  %v83 = vadd.f32 %v30, %v82
  %v84 = vpop.f32.mrb[0].mxu0
  %v85 = vpop.f32.mrb[0].mxu0
  %v86 = vpop.f32.mrb[0].mxu0
  %87 = vdwg.mxu0
  %88 = vmax.xlane.f32.xlu0 %v83
  %v89 = vpop.xlane.xlu0 %88
  %v90 = vsub.f32 %v83, %v89
  %v91 = vmul.f32 %v90, 1.442695
  %v92 = vpow.pop %v91
  %93 = vadd.xlane.f32.xlu0 %v92
  %v94 = vpop.xlane.xlu0 %93
  %v95 = vrcp.pop %v94
  %v96 = vmul.f32 %v92, %v95
  %97 = vst [vmem:[%s4] sm:$0xff] %v96
  %v98 = vld [vmem:[%s3] sm:$0xff]
  %v99 = vlog2.pop %v98
  %v100 = vmul.f32 %v99, 0.6931472
  %v101 = vsub.f32 0.0, %v100
  %v102 = vlog2.pop %v101
  %v103 = vmul.f32 %v102, 0.6931472
  %v104 = vsub.f32 0.0, %v103
  %v105 = vadd.f32 %v83, %v104
  %106 = vmax.xlane.f32.xlu0 %v105
  %v107 = vpop.xlane.xlu0 %106
  %v108 = vlaneseq
  %v109 = vand.u32 %v108, 127
  %vm110 = vcmp.ge.f32.partialorder %v105, %v107
  %v111 = vsel %vm110, %v109, 128
  %v112 = vand.u32 %v111, 65535
  %v113 = vshra.s32 %v111, 16
  %v114 = vcvt.s32.f32 %v112
  %v115 = vcvt.s32.f32 %v113
  %116 = vmin.xlane.f32.xlu0 %v115
  %v117 = vpop.xlane.xlu0 %116
  %vm118 = vcmp.eq.f32.partialorder %v115, %v117
  %v119 = vsel %vm118, %v114, inf
  %120 = vmin.xlane.f32.xlu0 %v119
  %v121 = vpop.xlane.xlu0 %120
  %v122 = vcvt.f32.s32 %v121
  %v123 = vcvt.f32.s32 %v117
  %v124 = vshll.u32 %v123, 16
  %v125 = vadd.s32 %v124, %v122
  %vm126 = vcmask 7168
  %127 = vst.msk [vmem:[%s5] sm:$0xff] %vm126, %v125
  // Predicated region
  $region18: #{discrete_head_forward.1} parent=0 // pred_check
    _
  $region19: #{discrete_head_forward.1} parent=0 // pred_check_branch
    %129 = sbr.rel (0) target = $region21
  $region20: #{discrete_head_forward.1} parent=0 // pred_region
    _
  $region21: #{discrete_head_forward.1} parent=0 // pred_fallthru
    _
  // Predicated region
  $region22: #{discrete_head_forward.1} parent=0 // pred_check
    _
  $region23: #{discrete_head_forward.1} parent=0 // pred_check_branch
    %131 = sbr.rel (0) target = $region25
  $region24: #{discrete_head_forward.1} parent=0 // pred_region
    _
  $region25: #{discrete_head_forward.1} parent=0 // pred_fallthru
    _
  // Predicated region
  $region26: #{discrete_head_forward.1} parent=0 // pred_check
    _
  $region27: #{discrete_head_forward.1} parent=0 // pred_check_branch
    %133 = sbr.rel (0) target = $region29
  $region28: #{discrete_head_forward.1} parent=0 // pred_region
    _
  $region29: #{discrete_head_forward.1} parent=0 // pred_fallthru
    _
  // Predicated region
  $region30: #{discrete_head_forward.1} parent=0 // pred_check
    _
  $region31: #{discrete_head_forward.1} parent=0 // pred_check_branch
    %135 = sbr.rel (0) target = $region33
  $region32: #{discrete_head_forward.1} parent=0 // pred_region
    _
  $region33: #{discrete_head_forward.1} parent=0 // pred_fallthru
    _

</llo_original>
